<compile_context>
chip_gen: v7x
topology: tpu7x:2x2x1
jax: 0.10.0
libtpu: 0.0.40
codegen_flags: <defaults>
</compile_context>

<pallas_src>
import functools

import numpy as np
import jax
import jax.numpy as jnp
from jax.experimental import pallas as pl
from jax.experimental.pallas import tpu as pltpu


# ----------------------------------------------------------------------------
# pltpu.roll direction self-check (documented to match jnp.roll; verified once
# on the real backend so the conv taps can never be silently mirrored).
# ----------------------------------------------------------------------------
def _roll_matches_jnp() -> bool:
    def k(x_ref, o_ref):
        o_ref[...] = pltpu.roll(x_ref[...], 1, 1)

    x = jnp.arange(2 * 128, dtype=jnp.float32).reshape(2, 128)
    y = pl.pallas_call(k, out_shape=jax.ShapeDtypeStruct((2, 128), jnp.float32))(x)
    return bool(jax.device_get(y)[0, 1] == 0.0)   # jnp.roll: out[0, 1] == x[0, 0]


_ROLL_IS_JNP = _roll_matches_jnp()


# ----------------------------------------------------------------------------
# the Pallas kernel: whole decoder_block forward pass
# ----------------------------------------------------------------------------
def _decoder_block_kernel(x_ref, skip_ref, up_ref, mask_ref,
                          wup_ref, bup_ref,
                          w1_ref, b1_ref, g1_ref, be1_ref,
                          w2_ref, b2_ref, g2_ref, be2_ref,
                          out_ref, *, h2, w2):
    """decoder_block forward on a (channels, n*h*w) lane-dense layout."""
    p2 = out_ref.shape[1]                       # n * 2H * 2W (flat upsampled pixels)

    def roll_lanes(a, s):
        """Circular roll along lanes, jnp.roll convention: out[f] = a[(f - s) % p2]."""
        s = s % p2
        if s == 0:
            return a
        return pltpu.roll(a, s if _ROLL_IS_JNP else p2 - s, axis=1)

    # ---- 1) F.interpolate(scale_factor=2, mode='bilinear'): one MXU matmul --
    xu = jnp.dot(x_ref[...], up_ref[...],
                 preferred_element_type=jnp.float32)            # (Ci, p2)

    # boundary masks (1, p2) for the per-image circular wrap of rows / columns
    m_i0 = mask_ref[0:1, :]     # i == 0
    m_i1 = mask_ref[1:2, :]     # i == h2 - 1
    m_j0 = mask_ref[2:3, :]     # j == 0
    m_j1 = mask_ref[3:4, :]     # j == w2 - 1

    def blend(mask, wrap, main):        # mask == 1 -> wrap, else main (VPU fma)
        return main + mask * (wrap - main)

    def shift_h(a, dh):                 # out[(n,i,j)] = a[(n, (i+dh) % h2, j)]
        if dh == 0:
            return a
        if dh == 1:
            return blend(m_i1, roll_lanes(a, (h2 - 1) * w2), roll_lanes(a, -w2))
        return blend(m_i0, roll_lanes(a, -(h2 - 1) * w2), roll_lanes(a, w2))

    def shift_w(a, dw):                 # out[(n,i,j)] = a[(n, i, (j+dw) % w2)]
        if dw == 0:
            return a
        if dw == 1:
            return blend(m_j1, roll_lanes(a, w2 - 1), roll_lanes(a, -1))
        return blend(m_j0, roll_lanes(a, -(w2 - 1)), roll_lanes(a, 1))

    def conv3x3_circular(a, w_ref_, b_ref_):
        # im2col: 9 circular taps stacked on sublanes, then one MXU matmul.
        rows = []
        for kh in range(3):
            ah = shift_h(a, kh - 1)
            for kw in range(3):
                rows.append(shift_w(ah, kw - 1))
        patches = jnp.concatenate(rows, axis=0)                 # (9*Cin, p2)
        return jnp.dot(w_ref_[...], patches,
                       preferred_element_type=jnp.float32) + b_ref_[...]

    def bn_relu(z, g_ref_, be_ref_, eps=1e-5):
        # training-mode BatchNorm2d: biased batch stats over (N, H, W)
        m = jnp.mean(z, axis=1, keepdims=True)                  # (Co, 1)
        zc = z - m
        v = jnp.mean(zc * zc, axis=1, keepdims=True)
        y = zc * (g_ref_[...] * jax.lax.rsqrt(v + eps)) + be_ref_[...]
        return jnp.maximum(y, 0.0)

    y = conv3x3_circular(xu, wup_ref, bup_ref)                  # conv_up
    cat = jnp.concatenate([y, skip_ref[...]], axis=0)           # torch.cat([x, skip], 1)
    z = bn_relu(conv3x3_circular(cat, w1_ref, b1_ref), g1_ref, be1_ref)
    z = bn_relu(conv3x3_circular(z, w2_ref, b2_ref), g2_ref, be2_ref)

    out_ref[...] = z                                            # single lane-dense store


# ----------------------------------------------------------------------------
# host-side wrapper (layout / operator / parameter glue only)
# ----------------------------------------------------------------------------
def _upsample_matrix(length: int) -> np.ndarray:
    """(2L, L) operator matching PyTorch bilinear 2x upsample, align_corners=False."""
    u = np.zeros((2 * length, length), dtype=np.float32)
    for p in range(2 * length):
        src = max((p + 0.5) / 2.0 - 0.5, 0.0)
        i0 = min(int(np.floor(src)), length - 1)
        i1 = min(i0 + 1, length - 1)
        lam = src - i0
        u[p, i0] += 1.0 - lam
        u[p, i1] += lam
    return u


def decoder_block_forward(x, skip, p):
    n, ci, h, w = x.shape
    co = p["w_up"].shape[0]
    h2, w2 = 2 * h, 2 * w
    p1, p2 = n * h * w, n * h2 * w2

    # host-side layout plumbing: channels -> sublanes, flat (n, i, j) -> lanes
    x2 = x.transpose(1, 0, 2, 3).reshape(ci, p1)
    skip2 = skip.transpose(1, 0, 2, 3).reshape(co, p2)

    # exact bilinear-2x operator (separable kron, block-diagonal over batch)
    per_sample = np.kron(_upsample_matrix(h), _upsample_matrix(w)).T     # (hw, 4hw)
    up_op = jnp.asarray(np.kron(np.eye(n, dtype=np.float32), per_sample))  # (p1, p2)

    # boundary masks for the in-kernel circular shifts (precomputed on host)
    ii = np.tile(np.repeat(np.arange(h2), w2), n)
    jj = np.tile(np.arange(w2), n * h2)
    bmask = jnp.asarray(np.stack([ii == 0, ii == h2 - 1,
                                  jj == 0, jj == w2 - 1]).astype(np.float32))

    # conv weights as (Cout, 9*Cin) matmul operands, rows ordered (tap, channel)
    wm = lambda wt: wt.transpose(0, 2, 3, 1).reshape(wt.shape[0], 9 * wt.shape[1])
    col = lambda v: v.reshape(-1, 1)

    args = (x2, skip2, up_op, bmask,
            wm(p["w_up"]), col(p["b_up"]),
            wm(p["w1"]), col(p["b1"]), col(p["g1"]), col(p["be1"]),
            wm(p["w2"]), col(p["b2"]), col(p["g2"]), col(p["be2"]))

    vmem = pl.BlockSpec(memory_space=pltpu.MemorySpace.VMEM)
    out2 = pl.pallas_call(
        functools.partial(_decoder_block_kernel, h2=h2, w2=w2),
        out_shape=jax.ShapeDtypeStruct((co, p2), jnp.float32),
        in_specs=[vmem] * len(args),
        out_specs=vmem,
        # TODO(synk): for production H/W, grid over batch / spatial tiles (with a
        # 1-pixel circular halo) and reduce the BN batch statistics across tiles.
    )(*args)

    # back to NCHW
    return out2.reshape(co, n, h2, w2).transpose(1, 0, 2, 3)


# ----------------------------------------------------------------------------
# deterministic parameter init (shapes per decoder_block.__init__)
# ----------------------------------------------------------------------------
def init_params(key, in_c, out_c):
    ks = jax.random.split(key, 10)
    nrm = lambda k, shp, s=0.1: (s * jax.random.normal(k, shp)).astype(jnp.float32)
    return dict(
        w_up=nrm(ks[0], (out_c, in_c, 3, 3)),          # conv_up
        b_up=nrm(ks[1], (out_c,)),
        w1=nrm(ks[2], (out_c, 2 * out_c, 3, 3)),        # conv_block.conv1
        b1=nrm(ks[3], (out_c,)),
        g1=(1.0 + nrm(ks[4], (out_c,))),                # conv_block.bn1
        be1=nrm(ks[5], (out_c,)),
        w2=nrm(ks[6], (out_c, out_c, 3, 3)),            # conv_block.conv2
        b2=nrm(ks[7], (out_c,)),
        g2=(1.0 + nrm(ks[8], (out_c,))),                # conv_block.bn2
        be2=nrm(ks[9], (out_c,)),
    )


# ----------------------------------------------------------------------------
# pure-JAX reference (correctness check of the kernel)
# ----------------------------------------------------------------------------
def _ref_upsample2x(x):
    def idx(l):
        pos = jnp.arange(2 * l, dtype=jnp.float32)
        src = jnp.maximum((pos + 0.5) / 2.0 - 0.5, 0.0)
        i0 = jnp.clip(jnp.floor(src).astype(jnp.int32), 0, l - 1)
        i1 = jnp.minimum(i0 + 1, l - 1)
        lam = src - i0.astype(jnp.float32)
        return i0, i1, lam
    h, w = x.shape[2], x.shape[3]
    h0, h1, lh = idx(h)
    w0, w1, lw = idx(w)
    xh = (x[:, :, h0, :] * (1.0 - lh)[None, None, :, None]
          + x[:, :, h1, :] * lh[None, None, :, None])
    return (xh[:, :, :, w0] * (1.0 - lw)[None, None, None, :]
            + xh[:, :, :, w1] * lw[None, None, None, :])


def _ref_conv3x3_circ(x, w, b):
    xp = jnp.pad(x, ((0, 0), (0, 0), (1, 1), (1, 1)), mode="wrap")
    y = jax.lax.conv_general_dilated(
        xp, w, window_strides=(1, 1), padding="VALID",
        dimension_numbers=("NCHW", "OIHW", "NCHW"),
        precision=jax.lax.Precision.HIGHEST)
    return y + b[None, :, None, None]


def _ref_bn_relu(x, g, b, eps=1e-5):
    m = jnp.mean(x, axis=(0, 2, 3), keepdims=True)
    v = jnp.mean(jnp.square(x - m), axis=(0, 2, 3), keepdims=True)
    y = (x - m) / jnp.sqrt(v + eps) * g[None, :, None, None] + b[None, :, None, None]
    return jnp.maximum(y, 0.0)


def reference_forward(x, skip, p):
    xu = _ref_upsample2x(x)
    y = _ref_conv3x3_circ(xu, p["w_up"], p["b_up"])
    z = jnp.concatenate([y, skip], axis=1)
    z = _ref_bn_relu(_ref_conv3x3_circ(z, p["w1"], p["b1"]), p["g1"], p["be1"])
    z = _ref_bn_relu(_ref_conv3x3_circ(z, p["w2"], p["b2"]), p["g2"], p["be2"])
    return z


# ----------------------------------------------------------------------------
if __name__ == "__main__":
    N, in_c, out_c, H, W = 2, 8, 4, 8, 8
    root = jax.random.PRNGKey(0)
    kx, ks, kp = jax.random.split(root, 3)

    x = jax.random.normal(kx, (N, in_c, H, W), dtype=jnp.float32)
    skip = jax.random.normal(ks, (N, out_c, 2 * H, 2 * W), dtype=jnp.float32)
    params = init_params(kp, in_c, out_c)

    fwd = jax.jit(decoder_block_forward)
    out = jax.block_until_ready(fwd(x, skip, params))
    assert out.shape == (N, out_c, 2 * H, 2 * W), out.shape

    ref = jax.block_until_ready(reference_forward(x, skip, params))
    max_err = float(jnp.max(jnp.abs(out - ref)))
    assert np.isfinite(max_err) and max_err < 1e-2, f"max abs err = {max_err}"

    print("KERNEL_OK")
</pallas_src>

<mosaic_0001>
module attributes {stable_mosaic.version = 11 : i64} {
  func.func @k(%arg0: memref<2x128xf32, #tpu.memory_space<vmem>>, %arg1: memref<2x128xf32, #tpu.memory_space<vmem>>) attributes {dimension_semantics = [], scalar_prefetch = 0 : i64, scratch_operands = 0 : i64, tpu.core_type = #tpu.core_type<tc>} {
    %c0 = arith.constant 0 : index
    %c0_0 = arith.constant 0 : index
    %0 = vector.load %arg0[%c0, %c0_0] : memref<2x128xf32, #tpu.memory_space<vmem>>, vector<2x128xf32>
    %c1_i32 = arith.constant 1 : i32
    %1 = tpu.dynamic_rotate %0 by %c1_i32 dim 1 : vector<2x128xf32>, i32 -> vector<2x128xf32>
    %c0_1 = arith.constant 0 : index
    %c0_2 = arith.constant 0 : index
    %2 = vector.load %arg1[%c0_1, %c0_2] : memref<2x128xf32, #tpu.memory_space<vmem>>, vector<2x128xf32>
    tpu.vector_store %arg1[%c0_1, %c0_2], %1 {strides = array<i32>} : memref<2x128xf32, #tpu.memory_space<vmem>>, vector<2x128xf32>,
    return
  }
}

</mosaic_0001>

<llo_original>
// kernel: tpu_custom_call.1
$region0: #{tpu_custom_call.1}
  #allocation0 [shape = 'u32[]', space=smem, size = 0x4, offset = 0x4, fixed_abs, tag = 'smem constant byte address 0x4 - core index']
  #allocation1 [shape = 'u32[144,128]{1,0:T(1,128)}', space=vmem, size = 0x12000, scoped, tag = 'internal scratch']
  %s0 = inlined_call_operand.hbm [shape: f32[2,128], index: 0, kind: input, shape index: {}]
  %s1 = inlined_call_operand.hbm [shape: f32[2,128], index: 1, kind: output, shape index: {}]
  %s2 = sld [smem:[#allocation0]]
  $region18: #{tpu_custom_call.1} parent=0
    _
  %s4 = ssub.s32 1, %s2
  %s5 = scalar_select 0, %s4, %s2
  $region1: #{tpu_custom_call.1} parent=0
    #allocation2 [shape = 'u8[1024]{0}', space=vmem, size = 0x400, scoped, tag = 'input window, operand 0, single buffered']
    #allocation3 [shape = 's32[1]{0}', space=sflag, size = 0x4, scoped, tag = 'scoped memory for tpu_custom_call.1']
    #allocation4 [shape = 's32[1]{0}', space=sflag, size = 0x4, scoped, tag = 'scoped memory for tpu_custom_call.1']
    #allocation5 [shape = 'u8[1024]{0}', space=vmem, size = 0x400, scoped, tag = 'output window, operand 0, single buffered']
    %6 = vsyncpa [#allocation3], 0
    %7 = vsyncpa [#allocation4], 0
    // Predicated region
    $region2: #{tpu_custom_call.1} parent=1 // pred_check
      _
    $region3: #{tpu_custom_call.1} parent=1 // pred_check_branch
      %9 = sbr.rel (0) target = $region5
    $region4: #{tpu_custom_call.1} parent=1 // pred_region
      %s11 = ssub.s32 32, 32
      %12 = vsyncadd [#allocation3], %s11
      %s14 = sshll.u32 [#allocation2], 4
      %s15 = int_to_ptr.vmem [resolvable:$true] %s14
      %17 = dma.hbm_to_vmem [thread:$0]  %s0, 32, %s15, [#allocation3]
    $region5: #{tpu_custom_call.1} parent=1 // pred_fallthru
      _
    // Predicated region
    $region6: #{tpu_custom_call.1} parent=1 // pred_check
      _
    $region7: #{tpu_custom_call.1} parent=1 // pred_check_branch
      %19 = sbr.rel (0) target = $region9
    $region8: #{tpu_custom_call.1} parent=1 // pred_region
      %20 = dma.done [#allocation3], 32
    $region9: #{tpu_custom_call.1} parent=1 // pred_fallthru
      _
    %v21 = vld [vmem:[#allocation2] sm:$0x3]
    %22 = vrot.lane.b32.xlu0 %v21, 1
    %v23 = vpop.permute.xlu0 %22
    %24 = vst [vmem:[#allocation5] sm:$0x3] %v23
    // Predicated region
    $region10: #{tpu_custom_call.1} parent=1 // pred_check
      _
    $region11: #{tpu_custom_call.1} parent=1 // pred_check_branch
      %26 = sbr.rel (0) target = $region13
    $region12: #{tpu_custom_call.1} parent=1 // pred_region
      %s28 = ssub.s32 32, 32
      %29 = vsyncadd [#allocation4], %s28
      %s31 = sshll.u32 [#allocation5], 4
      %s32 = int_to_ptr.vmem [resolvable:$true] %s31
      %34 = dma.vmem_to_hbm [thread:$0]  %s32, 32, %s1, [#allocation4]
    $region13: #{tpu_custom_call.1} parent=1 // pred_fallthru
      _
    // Predicated region
    $region14: #{tpu_custom_call.1} parent=1 // pred_check
      _
    $region15: #{tpu_custom_call.1} parent=1 // pred_check_branch
      %36 = sbr.rel (0) target = $region17
    $region16: #{tpu_custom_call.1} parent=1 // pred_region
      %37 = dma.done [#allocation4], 32
    $region17: #{tpu_custom_call.1} parent=1 // pred_fallthru
      _
    %38 = vsyncpa [#allocation3], 1
    %39 = vsyncpa [#allocation4], 1

</llo_original>
